<compile_context>
chip_gen: v5e
topology: v5e:2x2
jax: 0.10.0
libtpu: 0.0.40
codegen_flags: <defaults>
</compile_context>

<pallas_src>
import functools

import jax
import jax.numpy as jnp
from jax.experimental import pallas as pl
from jax.experimental.pallas import tpu as pltpu

MARGIN = 1.0   # deterministic in-script "parameter" (module __init__ arg)
EPS = 1e-9


def _round_up(x, m):
    return (x + m - 1) // m * m


def _per_row_vmem_bytes(width_elems, itemsize):
    """Honest VMEM bytes per (super-)row for one grid step."""
    w_pad = _round_up(width_elems, 128)
    inputs = 2 * 2 * w_pad * itemsize   # 2 embeddings x 2 pipeline buffers
    target = 2 * 128 * 4                # (tb, k) f32 target, lane-padded, 2 bufs
    temps = 4 * w_pad * 4               # f32 casts / diff / square temporaries
    scratch = 128 * 4                   # (tb, k) f32 distance accumulator
    return inputs + target + temps + scratch


def _constell_loss_kernel(o1_ref, o2_ref, tgt_ref, out_ref, dist_ref, *,
                          k, w_total, tb, rows, margin, eps):
    i = pl.program_id(0)          # batch (super-row) block
    j = pl.program_id(1)          # feature block (reduction axis)

    @pl.when(j == 0)
    def _():
        dist_ref[...] = jnp.zeros_like(dist_ref)

    # Stream native dtype, widen on the VPU.
    o1 = o1_ref[...].astype(jnp.float32)                    # (tb, tw)
    o2 = o2_ref[...].astype(jnp.float32)
    diff = o2 - o1
    sq = diff * diff                                         # (tb, tw) f32

    tw = sq.shape[1]
    if w_total % tw != 0:
        # Overhanging feature columns of the last feature block -> zero them.
        col = jax.lax.broadcasted_iota(jnp.int32, sq.shape, 1) + j * tw
        sq = jnp.where(col < w_total, sq, 0.0)

    # Segmented lane reduction: segment m of super-row r is original row
    # r*k + m.  k is static and small; layout stays lane-dense throughout.
    seg = tw // k
    colk = jax.lax.broadcasted_iota(jnp.int32, dist_ref.shape, 1)  # (tb, k)
    acc = jnp.zeros(dist_ref.shape, jnp.float32)
    for m in range(k):
        part = jnp.sum(sq[:, m * seg:(m + 1) * seg], axis=1, keepdims=True)
        acc = acc + jnp.where(colk == m, part, 0.0)
    dist_ref[...] += acc

    @pl.when(j == pl.num_programs(1) - 1)
    def _():
        d = dist_ref[...]                                    # (tb, k) distances
        t = tgt_ref[...]                                     # (tb, k) f32
        hinge = jnp.maximum(margin - jnp.sqrt(d + eps), 0.0)
        losses = 0.5 * (t * d + (1.0 - t) * hinge * hinge)
        # Mask super-rows beyond the true row count (overhanging last block).
        row = jax.lax.broadcasted_iota(jnp.int32, losses.shape, 0) + i * tb
        losses = jnp.where(row < rows, losses, 0.0)
        # Lane-dense (1, 1, 128) output line: unmasked stores, tiny writeback.
        out_ref[...] = jnp.full(out_ref.shape, jnp.sum(losses), jnp.float32)


def constell_loss(output1, output2, target, *, margin=MARGIN, eps=EPS,
                  size_average=True, block_rows=None, _vmem_budget_bytes=None):
    """output1, output2: (B, D) float arrays; target: (B,) of {0,1}."""
    B, D = output1.shape
    assert output2.shape == (B, D) and target.shape[0] == B
    itemsize = jnp.dtype(output1.dtype).itemsize

    # ---- lane packing: fold k consecutive rows into one lane-dense row ----
    if D < 128 and 128 % D == 0 and B % (128 // D) == 0:
        k = 128 // D
    else:
        # TODO(synk): D that neither reaches nor divides 128 streams with
        #             partially filled lane lines; general padding/packing is
        #             not implemented (correct, just less DMA-efficient).
        k = 1
    rows = B // k
    W = k * D

    o1 = output1.reshape(rows, W)
    o2 = output2.reshape(rows, W)
    tgt = target.astype(jnp.float32).reshape(rows, k)

    # ---- VMEM budget (generation aware) ------------------------------------
    if _vmem_budget_bytes is None:
        try:
            vmem_cap = int(pltpu.get_tpu_info().vmem_capacity_bytes)
        except Exception:
            vmem_cap = 64 * 1024 * 1024                # v7x-safe fallback
        # ~1/3 of physical VMEM for accounted buffers (<=40 MiB on v5e/v6e,
        # ~21 MiB on v7x), leaving headroom for compiler scratch + output.
        budget = min(max(vmem_cap // 3, 12 * 1024 * 1024), 40 * 1024 * 1024)
    else:
        budget = int(_vmem_budget_bytes)
    vmem_limit = int(budget + 8 * 1024 * 1024)

    # ---- feature-dim tiling for very wide embeddings -----------------------
    tw = W
    while _per_row_vmem_bytes(tw, itemsize) * 8 > budget and tw > 128:
        tw = max(128, _round_up((tw + 1) // 2, 128))
    nd = pl.cdiv(W, tw)

    # ---- batch tiling -------------------------------------------------------
    per_row = _per_row_vmem_bytes(tw, itemsize)
    max_tb = max(8, (budget // per_row) // 8 * 8)

    if block_rows is not None:
        tb = max(1, int(block_rows) // k)
        tb = rows if tb >= rows else min(max_tb, max(8, _round_up(tb, 8)))
    else:
        tb = min(max_tb, _round_up(rows, 8))
        if tb >= rows:
            tb = rows
            # Keep >= 2 batch blocks when possible so both v7x TensorCores
            # stream (one extra ~0.35us step on single-TC chips is noise).
            if rows >= 16 and nd == 1:
                tb = max(8, _round_up(pl.cdiv(rows, 2), 8))
    nb = pl.cdiv(rows, tb)

    kernel = functools.partial(
        _constell_loss_kernel,
        k=k, w_total=W, tb=tb, rows=rows,
        margin=float(margin), eps=float(eps),
    )

    cost = pl.CostEstimate(
        flops=3 * B * D + 8 * B,
        transcendentals=B,
        bytes_accessed=2 * B * D * itemsize + B * 4 + nb * 128 * 4,
    )

    partials = pl.pallas_call(
        kernel,
        out_shape=jax.ShapeDtypeStruct((nb, 1, 128), jnp.float32),
        grid_spec=pltpu.PrefetchScalarGridSpec(
            num_scalar_prefetch=0,
            grid=(nb, nd),
            in_specs=[
                pl.BlockSpec((tb, tw), lambda i, j: (i, j)),   # output1 tile
                pl.BlockSpec((tb, tw), lambda i, j: (i, j)),   # output2 tile
                pl.BlockSpec((tb, k), lambda i, j: (i, 0)),    # target tile
            ],
            out_specs=pl.BlockSpec((1, 1, 128), lambda i, j: (i, 0, 0)),
            scratch_shapes=[pltpu.VMEM((tb, k), jnp.float32)],
        ),
        compiler_params=pltpu.CompilerParams(
            dimension_semantics=("parallel", "arbitrary"),
            vmem_limit_bytes=vmem_limit,
        ),
        cost_estimate=cost,
    )(o1, o2, tgt)

    total = jnp.sum(partials[:, 0, 0])
    return total / B if size_average else total


def _reference(output1, output2, target, *, margin=MARGIN, eps=EPS,
               size_average=True):
    d = jnp.sum((output2.astype(jnp.float32) - output1.astype(jnp.float32)) ** 2,
                axis=1)
    t = target.astype(jnp.float32)
    losses = 0.5 * (t * d + (1.0 - t) * jnp.maximum(margin - jnp.sqrt(d + eps),
                                                    0.0) ** 2)
    return jnp.mean(losses) if size_average else jnp.sum(losses)


if __name__ == "__main__":
    key = jax.random.PRNGKey(0)

    # Case 1: small shapes consistent with the module (packed path, 1 block).
    k1, k2, k3 = jax.random.split(key, 3)
    B, D = 8, 32
    o1 = jax.random.normal(k1, (B, D), dtype=jnp.float32)
    o2 = jax.random.normal(k2, (B, D), dtype=jnp.float32)
    tgt = jax.random.bernoulli(k3, 0.5, (B,)).astype(jnp.int32)

    loss = constell_loss(o1, o2, tgt, size_average=True)
    jax.block_until_ready(loss)
    ref = _reference(o1, o2, tgt, size_average=True)
    assert jnp.allclose(loss, ref, rtol=1e-5, atol=1e-6), (loss, ref)

    # Case 2: multi-block grid, explicit block_rows, masked tail, sum reduce.
    k4, k5, k6 = jax.random.split(jax.random.PRNGKey(1), 3)
    B2, D2 = 200, 32
    p1 = jax.random.normal(k4, (B2, D2), dtype=jnp.float32)
    p2 = jax.random.normal(k5, (B2, D2), dtype=jnp.float32)
    pt = jax.random.bernoulli(k6, 0.5, (B2,)).astype(jnp.int32)

    loss2 = constell_loss(p1, p2, pt, size_average=False, block_rows=64)
    jax.block_until_ready(loss2)
    ref2 = _reference(p1, p2, pt, size_average=False)
    assert jnp.allclose(loss2, ref2, rtol=1e-5, atol=1e-4), (loss2, ref2)

    # Case 3: native bf16 streaming (cast to f32 inside the kernel).
    b1 = o1.astype(jnp.bfloat16)
    b2 = o2.astype(jnp.bfloat16)
    loss3 = constell_loss(b1, b2, tgt, size_average=True)
    jax.block_until_ready(loss3)
    ref3 = _reference(b1, b2, tgt, size_average=True)
    assert jnp.allclose(loss3, ref3, rtol=1e-4, atol=1e-5), (loss3, ref3)

    # Case 4: D not a divisor of 128 (fallback k=1) + auto 2-block split.
    k7, k8, k9 = jax.random.split(jax.random.PRNGKey(2), 3)
    B4, D4 = 40, 96
    q1 = jax.random.normal(k7, (B4, D4), dtype=jnp.float32)
    q2 = jax.random.normal(k8, (B4, D4), dtype=jnp.float32)
    qt = jax.random.bernoulli(k9, 0.5, (B4,)).astype(jnp.int32)
    loss4 = constell_loss(q1, q2, qt, size_average=True)
    jax.block_until_ready(loss4)
    ref4 = _reference(q1, q2, qt, size_average=True)
    assert jnp.allclose(loss4, ref4, rtol=1e-5, atol=1e-5), (loss4, ref4)

    # Case 5: wide-D path with a tiny forced VMEM budget -> feature-dim grid
    # axis + distance accumulator + row AND column overhang masking.
    ka, kb, kc = jax.random.split(jax.random.PRNGKey(3), 3)
    B5, D5 = 20, 1000
    r1 = jax.random.normal(ka, (B5, D5), dtype=jnp.float32)
    r2 = jax.random.normal(kb, (B5, D5), dtype=jnp.float32)
    rt = jax.random.bernoulli(kc, 0.5, (B5,)).astype(jnp.int32)
    loss5 = constell_loss(r1, r2, rt, size_average=True,
                          _vmem_budget_bytes=64 * 1024)
    jax.block_until_ready(loss5)
    ref5 = _reference(r1, r2, rt, size_average=True)
    assert jnp.allclose(loss5, ref5, rtol=1e-5, atol=1e-4), (loss5, ref5)

    print("KERNEL_OK")
</pallas_src>

<mosaic_0001>
module attributes {stable_mosaic.version = 11 : i64} {
  func.func @_constell_loss_kernel(%arg0: i32, %arg1: i32, %arg2: memref<2x128xf32, #tpu.memory_space<vmem>>, %arg3: memref<2x128xf32, #tpu.memory_space<vmem>>, %arg4: memref<2x4xf32, #tpu.memory_space<vmem>>, %arg5: memref<1x1x128xf32, #tpu.memory_space<vmem>>, %arg6: memref<2x4xf32, #tpu.memory_space<vmem>>) attributes {dimension_semantics = [#tpu.dimension_semantics<parallel>, #tpu.dimension_semantics<arbitrary>], iteration_bounds = array<i64: 1, 1>, scalar_prefetch = 0 : i64, scratch_operands = 1 : i64, tpu.core_type = #tpu.core_type<tc>, window_params = [{transform_indices = @transform_0, window_bounds = array<i64: 2, 128>}, {transform_indices = @transform_1, window_bounds = array<i64: 2, 128>}, {transform_indices = @transform_2, window_bounds = array<i64: 2, 4>}, {transform_indices = @transform_3, window_bounds = array<i64: 1, 1, 128>}]} {
    %c0_i32 = arith.constant 0 : i32
    %0 = arith.cmpi eq, %arg1, %c0_i32 : i32
    %1 = arith.extui %0 : i1 to i32
    %c0_i32_0 = arith.constant 0 : i32
    %2 = arith.cmpi ne, %1, %c0_i32_0 : i32
    scf.if %2 {
      %cst_19 = arith.constant 0.000000e+00 : f32
      %55 = vector.broadcast %cst_19 : f32 to vector<2x4xf32>
      %c0_20 = arith.constant 0 : index
      %c0_21 = arith.constant 0 : index
      %56 = vector.load %arg6[%c0_20, %c0_21] : memref<2x4xf32, #tpu.memory_space<vmem>>, vector<2x4xf32>
      tpu.vector_store %arg6[%c0_20, %c0_21], %55 {strides = array<i32>} : memref<2x4xf32, #tpu.memory_space<vmem>>, vector<2x4xf32>,
    } else {
    }
    %c0 = arith.constant 0 : index
    %c0_1 = arith.constant 0 : index
    %3 = vector.load %arg2[%c0, %c0_1] : memref<2x128xf32, #tpu.memory_space<vmem>>, vector<2x128xf32>
    %c0_2 = arith.constant 0 : index
    %c0_3 = arith.constant 0 : index
    %4 = vector.load %arg3[%c0_2, %c0_3] : memref<2x128xf32, #tpu.memory_space<vmem>>, vector<2x128xf32>
    %5 = arith.subf %4, %3 : vector<2x128xf32>
    %6 = arith.mulf %5, %5 : vector<2x128xf32>
    %7 = tpu.iota {dimensions = array<i32: 1>} : vector<2x4xi32>
    %cst = arith.constant 0.000000e+00 : f32
    %8 = vector.broadcast %cst : f32 to vector<2x4xf32>
    %9 = vector.extract_strided_slice %6 {offsets = [0, 0], sizes = [2, 32], strides = [1, 1]} : vector<2x128xf32> to vector<2x32xf32>
    %cst_4 = arith.constant dense<0.000000e+00> : vector<2xf32>
    %10 = vector.multi_reduction <add>, %9, %cst_4 [1] : vector<2x32xf32> to vector<2xf32>
    %11 = vector.shape_cast %10 : vector<2xf32> to vector<2x1xf32>
    %c0_i32_5 = arith.constant 0 : i32
    %12 = vector.broadcast %c0_i32_5 : i32 to vector<2x4xi32>
    %13 = arith.cmpi eq, %7, %12 : vector<2x4xi32>
    %cst_6 = arith.constant 0.000000e+00 : f32
    %14 = vector.shape_cast %11 : vector<2x1xf32> to vector<2x1xf32>
    %15 = vector.broadcast %14 : vector<2x1xf32> to vector<2x4xf32>
    %16 = vector.broadcast %cst_6 : f32 to vector<2x4xf32>
    %17 = arith.select %13, %15, %16 : vector<2x4xi1>, vector<2x4xf32>
    %18 = arith.addf %8, %17 : vector<2x4xf32>
    %19 = vector.extract_strided_slice %6 {offsets = [0, 32], sizes = [2, 32], strides = [1, 1]} : vector<2x128xf32> to vector<2x32xf32>
    %cst_7 = arith.constant dense<0.000000e+00> : vector<2xf32>
    %20 = vector.multi_reduction <add>, %19, %cst_7 [1] : vector<2x32xf32> to vector<2xf32>
    %21 = vector.shape_cast %20 : vector<2xf32> to vector<2x1xf32>
    %c1_i32 = arith.constant 1 : i32
    %22 = vector.broadcast %c1_i32 : i32 to vector<2x4xi32>
    %23 = arith.cmpi eq, %7, %22 : vector<2x4xi32>
    %cst_8 = arith.constant 0.000000e+00 : f32
    %24 = vector.shape_cast %21 : vector<2x1xf32> to vector<2x1xf32>
    %25 = vector.broadcast %24 : vector<2x1xf32> to vector<2x4xf32>
    %26 = vector.broadcast %cst_8 : f32 to vector<2x4xf32>
    %27 = arith.select %23, %25, %26 : vector<2x4xi1>, vector<2x4xf32>
    %28 = arith.addf %18, %27 : vector<2x4xf32>
    %29 = vector.extract_strided_slice %6 {offsets = [0, 64], sizes = [2, 32], strides = [1, 1]} : vector<2x128xf32> to vector<2x32xf32>
    %cst_9 = arith.constant dense<0.000000e+00> : vector<2xf32>
    %30 = vector.multi_reduction <add>, %29, %cst_9 [1] : vector<2x32xf32> to vector<2xf32>
    %31 = vector.shape_cast %30 : vector<2xf32> to vector<2x1xf32>
    %c2_i32 = arith.constant 2 : i32
    %32 = vector.broadcast %c2_i32 : i32 to vector<2x4xi32>
    %33 = arith.cmpi eq, %7, %32 : vector<2x4xi32>
    %cst_10 = arith.constant 0.000000e+00 : f32
    %34 = vector.shape_cast %31 : vector<2x1xf32> to vector<2x1xf32>
    %35 = vector.broadcast %34 : vector<2x1xf32> to vector<2x4xf32>
    %36 = vector.broadcast %cst_10 : f32 to vector<2x4xf32>
    %37 = arith.select %33, %35, %36 : vector<2x4xi1>, vector<2x4xf32>
    %38 = arith.addf %28, %37 : vector<2x4xf32>
    %39 = vector.extract_strided_slice %6 {offsets = [0, 96], sizes = [2, 32], strides = [1, 1]} : vector<2x128xf32> to vector<2x32xf32>
    %cst_11 = arith.constant dense<0.000000e+00> : vector<2xf32>
    %40 = vector.multi_reduction <add>, %39, %cst_11 [1] : vector<2x32xf32> to vector<2xf32>
    %41 = vector.shape_cast %40 : vector<2xf32> to vector<2x1xf32>
    %c3_i32 = arith.constant 3 : i32
    %42 = vector.broadcast %c3_i32 : i32 to vector<2x4xi32>
    %43 = arith.cmpi eq, %7, %42 : vector<2x4xi32>
    %cst_12 = arith.constant 0.000000e+00 : f32
    %44 = vector.shape_cast %41 : vector<2x1xf32> to vector<2x1xf32>
    %45 = vector.broadcast %44 : vector<2x1xf32> to vector<2x4xf32>
    %46 = vector.broadcast %cst_12 : f32 to vector<2x4xf32>
    %47 = arith.select %43, %45, %46 : vector<2x4xi1>, vector<2x4xf32>
    %48 = arith.addf %38, %47 : vector<2x4xf32>
    %c0_13 = arith.constant 0 : index
    %c0_14 = arith.constant 0 : index
    %49 = vector.load %arg6[%c0_13, %c0_14] : memref<2x4xf32, #tpu.memory_space<vmem>>, vector<2x4xf32>
    %50 = arith.addf %49, %48 : vector<2x4xf32>
    %c0_15 = arith.constant 0 : index
    %c0_16 = arith.constant 0 : index
    %51 = vector.load %arg6[%c0_15, %c0_16] : memref<2x4xf32, #tpu.memory_space<vmem>>, vector<2x4xf32>
    tpu.vector_store %arg6[%c0_15, %c0_16], %50 {strides = array<i32>} : memref<2x4xf32, #tpu.memory_space<vmem>>, vector<2x4xf32>,
    %c0_i32_17 = arith.constant 0 : i32
    %52 = arith.cmpi eq, %arg1, %c0_i32_17 : i32
    %53 = arith.extui %52 : i1 to i32
    %c0_i32_18 = arith.constant 0 : i32
    %54 = arith.cmpi ne, %53, %c0_i32_18 : i32
    scf.if %54 {
      %c0_19 = arith.constant 0 : index
      %c0_20 = arith.constant 0 : index
      %55 = vector.load %arg6[%c0_19, %c0_20] : memref<2x4xf32, #tpu.memory_space<vmem>>, vector<2x4xf32>
      %c0_21 = arith.constant 0 : index
      %c0_22 = arith.constant 0 : index
      %56 = vector.load %arg4[%c0_21, %c0_22] : memref<2x4xf32, #tpu.memory_space<vmem>>, vector<2x4xf32>
      %cst_23 = arith.constant 9.99999971E-10 : f32
      %57 = vector.broadcast %cst_23 : f32 to vector<2x4xf32>
      %58 = arith.addf %55, %57 : vector<2x4xf32>
      %59 = math.sqrt %58 : vector<2x4xf32>
      %cst_24 = arith.constant 1.000000e+00 : f32
      %60 = vector.broadcast %cst_24 : f32 to vector<2x4xf32>
      %61 = arith.subf %60, %59 : vector<2x4xf32>
      %cst_25 = arith.constant 0.000000e+00 : f32
      %62 = vector.broadcast %cst_25 : f32 to vector<2x4xf32>
      %63 = arith.maximumf %61, %62 : vector<2x4xf32>
      %64 = arith.mulf %56, %55 : vector<2x4xf32>
      %cst_26 = arith.constant 1.000000e+00 : f32
      %65 = vector.broadcast %cst_26 : f32 to vector<2x4xf32>
      %66 = arith.subf %65, %56 : vector<2x4xf32>
      %67 = arith.mulf %66, %63 : vector<2x4xf32>
      %68 = arith.mulf %67, %63 : vector<2x4xf32>
      %69 = arith.addf %64, %68 : vector<2x4xf32>
      %cst_27 = arith.constant 5.000000e-01 : f32
      %70 = vector.broadcast %cst_27 : f32 to vector<2x4xf32>
      %71 = arith.mulf %70, %69 : vector<2x4xf32>
      %72 = tpu.iota {dimensions = array<i32: 0>} : vector<2x4xi32>
      %c2_i32_28 = arith.constant 2 : i32
      %73 = arith.muli %arg0, %c2_i32_28 : i32
      %74 = vector.broadcast %73 : i32 to vector<2x4xi32>
      %75 = arith.addi %72, %74 : vector<2x4xi32>
      %c2_i32_29 = arith.constant 2 : i32
      %76 = vector.broadcast %c2_i32_29 : i32 to vector<2x4xi32>
      %77 = arith.cmpi slt, %75, %76 : vector<2x4xi32>
      %cst_30 = arith.constant 0.000000e+00 : f32
      %78 = vector.broadcast %cst_30 : f32 to vector<2x4xf32>
      %79 = arith.select %77, %71, %78 : vector<2x4xi1>, vector<2x4xf32>
      %80 = vector.shape_cast %79 : vector<2x4xf32> to vector<1x2x4xf32>
      %cst_31 = arith.constant dense<0.000000e+00> : vector<1xf32>
      %81 = vector.multi_reduction <add>, %80, %cst_31 [1, 2] : vector<1x2x4xf32> to vector<1xf32>
      %82 = vector.shape_cast %81 : vector<1xf32> to vector<1x1x1xf32>
      %83 = vector.extract %82[0, 0, 0] : f32 from vector<1x1x1xf32>
      %84 = vector.broadcast %83 : f32 to vector<1x1x128xf32>
      %c0_32 = arith.constant 0 : index
      %c0_33 = arith.constant 0 : index
      %c0_34 = arith.constant 0 : index
      %85 = vector.load %arg5[%c0_32, %c0_33, %c0_34] : memref<1x1x128xf32, #tpu.memory_space<vmem>>, vector<1x1x128xf32>
      tpu.vector_store %arg5[%c0_32, %c0_33, %c0_34], %84 {strides = array<i32>} : memref<1x1x128xf32, #tpu.memory_space<vmem>>, vector<1x1x128xf32>,
    } else {
    }
    return
  }
  func.func @transform_0(%arg0: i32, %arg1: i32) -> (i32, i32) {
    %c0_i32 = arith.constant 0 : i32
    return %arg0, %arg1 : i32, i32
  }
  func.func @transform_1(%arg0: i32, %arg1: i32) -> (i32, i32) {
    %c0_i32 = arith.constant 0 : i32
    return %arg0, %arg1 : i32, i32
  }
  func.func @transform_2(%arg0: i32, %arg1: i32) -> (i32, i32) {
    %c0_i32 = arith.constant 0 : i32
    %c0_i32_0 = arith.constant 0 : i32
    return %arg0, %c0_i32 : i32, i32
  }
  func.func @transform_3(%arg0: i32, %arg1: i32) -> (i32, i32, i32) {
    %c0_i32 = arith.constant 0 : i32
    %c0_i32_0 = arith.constant 0 : i32
    %c0_i32_1 = arith.constant 0 : i32
    return %arg0, %c0_i32, %c0_i32_0 : i32, i32, i32
  }
}

</mosaic_0001>

<llo_original>
// kernel: tpu_custom_call.1
$region0: #{tpu_custom_call.1}
  #allocation0 [shape = 'u32[]', space=smem, size = 0x4, offset = 0x4, fixed_abs, tag = 'smem constant byte address 0x4 - core index']
  #allocation1 [shape = 'u32[72,128]{1,0:T(1,128)}', space=vmem, size = 0x9000, scoped, tag = 'internal scratch']
  #allocation2 [shape = 'f32[2,4]{1,0:T(2,128)}', space=vmem, size = 0x400, scoped, tag = 'scratch operand']
  %s0 = inlined_call_operand.hbm [shape: f32[2,128], index: 0, kind: input, shape index: {}]
  %s1 = inlined_call_operand.hbm [shape: f32[2,128], index: 1, kind: input, shape index: {}]
  %s2 = inlined_call_operand.hbm [shape: f32[2,4], index: 2, kind: input, shape index: {}]
  %s3 = inlined_call_operand.hbm [shape: f32[1,1,128], index: 3, kind: output, shape index: {}]
  %s4 = sld [smem:[#allocation0]]
  $region42: #{tpu_custom_call.1} parent=0
    _
  %s6 = ssub.s32 1, %s4
  %s7 = scalar_select 0, %s6, %s4
  $region1: #{tpu_custom_call.1} parent=0
    #allocation3 [shape = 'u8[1024]{0}', space=vmem, size = 0x400, scoped, tag = 'input window, operand 0, single buffered']
    #allocation4 [shape = 's32[1]{0}', space=sflag, size = 0x4, scoped, tag = 'scoped memory for tpu_custom_call.1']
    #allocation5 [shape = 's32[1]{0}', space=sflag, size = 0x4, scoped, tag = 'scoped memory for tpu_custom_call.1']
    #allocation6 [shape = 'u8[1024]{0}', space=vmem, size = 0x400, scoped, tag = 'input window, operand 1, single buffered']
    #allocation7 [shape = 's32[1]{0}', space=sflag, size = 0x4, scoped, tag = 'scoped memory for tpu_custom_call.1']
    #allocation8 [shape = 'u8[1024]{0}', space=vmem, size = 0x400, scoped, tag = 'input window, operand 2, single buffered']
    #allocation9 [shape = 'u8[512]{0}', space=vmem, size = 0x400, scoped, tag = 'output window, operand 0, single buffered']
    %8 = vsyncpa [#allocation4], 0
    %9 = vsyncpa [#allocation7], 0
    %10 = vsyncpa [#allocation5], 0
    // Predicated region
    $region2: #{tpu_custom_call.1} parent=1 // pred_check
      _
    $region3: #{tpu_custom_call.1} parent=1 // pred_check_branch
      %12 = sbr.rel (0) target = $region5
    $region4: #{tpu_custom_call.1} parent=1 // pred_region
      %14 = vsyncadd [#allocation4], 0
      %s16 = sshll.u32 %s0, 4
      %s17 = int_to_ptr.hbm [resolvable:$true] %s16
      %s18 = sshll.u32 [#allocation3], 4
      %s19 = int_to_ptr.vmem [resolvable:$true] %s18
      %21 = dma.hbm_to_vmem [thread:$0]  %s17, 32, %s19, [#allocation4]
    $region5: #{tpu_custom_call.1} parent=1 // pred_fallthru
      _
    // Predicated region
    $region6: #{tpu_custom_call.1} parent=1 // pred_check
      _
    $region7: #{tpu_custom_call.1} parent=1 // pred_check_branch
      %23 = sbr.rel (0) target = $region9
    $region8: #{tpu_custom_call.1} parent=1 // pred_region
      %25 = vsyncadd [#allocation7], 0
      %s27 = sshll.u32 %s1, 4
      %s28 = int_to_ptr.hbm [resolvable:$true] %s27
      %s29 = sshll.u32 [#allocation6], 4
      %s30 = int_to_ptr.vmem [resolvable:$true] %s29
      %32 = dma.hbm_to_vmem [thread:$0]  %s28, 32, %s30, [#allocation7]
    $region9: #{tpu_custom_call.1} parent=1 // pred_fallthru
      _
    // Predicated region
    $region10: #{tpu_custom_call.1} parent=1 // pred_check
      _
    $region11: #{tpu_custom_call.1} parent=1 // pred_check_branch
      %34 = sbr.rel (0) target = $region13
    $region12: #{tpu_custom_call.1} parent=1 // pred_region
      %36 = vsyncadd [#allocation7], 0
      %s38 = sshll.u32 %s2, 4
      %s39 = int_to_ptr.hbm [resolvable:$true] %s38
      %s40 = sshll.u32 [#allocation8], 4
      %s41 = int_to_ptr.vmem [resolvable:$true] %s40
      %43 = dma.hbm_to_vmem [thread:$0]  %s39, 32, %s41, [#allocation7]
    $region13: #{tpu_custom_call.1} parent=1 // pred_fallthru
      _
    // Predicated region
    $region14: #{tpu_custom_call.1} parent=1 // pred_check
      _
    $region15: #{tpu_custom_call.1} parent=1 // pred_check_branch
      %45 = sbr.rel (0) target = $region17
    $region16: #{tpu_custom_call.1} parent=1 // pred_region
      %47 = dma.done [#allocation4], 32
    $region17: #{tpu_custom_call.1} parent=1 // pred_fallthru
      _
    // Predicated region
    $region18: #{tpu_custom_call.1} parent=1 // pred_check
      _
    $region19: #{tpu_custom_call.1} parent=1 // pred_check_branch
      %49 = sbr.rel (0) target = $region21
    $region20: #{tpu_custom_call.1} parent=1 // pred_region
      %51 = dma.done [#allocation7], 32
    $region21: #{tpu_custom_call.1} parent=1 // pred_fallthru
      _
    // Predicated region
    $region22: #{tpu_custom_call.1} parent=1 // pred_check
      _
    $region23: #{tpu_custom_call.1} parent=1 // pred_check_branch
      %53 = sbr.rel (0) target = $region25
    $region24: #{tpu_custom_call.1} parent=1 // pred_region
      %55 = dma.done [#allocation7], 32
    $region25: #{tpu_custom_call.1} parent=1 // pred_fallthru
      _
    %p56 = scmp.eq.s32.totalorder 0, 0
    // Predicated region
    $region26: #{tpu_custom_call.1} parent=1 // pred_check
      %p57 = pneg %p56
    $region27: #{tpu_custom_call.1} parent=1 // pred_check_branch
      %59 = sbr.rel (%p57) target = $region29
    $region28: #{tpu_custom_call.1} parent=1 // pred_region
      %vm60 = vcmask 25600
      %61 = vst.msk [vmem:[#allocation2] sm:$0x3] %vm60, 0.0
    $region29: #{tpu_custom_call.1} parent=1 // pred_fallthru
      _
    %v62 = vld [vmem:[#allocation3] sm:$0x3]
    %v63 = vld [vmem:[#allocation6] sm:$0x3]
    %v64 = vsub.f32 %v63, %v62
    %v65 = vmul.f32 %v64, %v64
    %v66 = vlaneseq
    %v67 = vand.u32 %v66, 127
    %vm68 = vcmask 254976
    %v69 = vsel %vm68, %v65, 0.0
    %70 = vadd.xlane.f32.xlu0 %v69
    %v71 = vpop.xlane.xlu0 %70
    %vm72 = vcmp.eq.s32.totalorder %v67, 0
    %v73 = vsel %vm72, %v71, 0.0
    %v74 = vadd.f32 %v73, 0.0
    %76 = vrot.lane.b32.xlu0 %v65, 96
    %v77 = vpop.permute.xlu0 %76
    %v79 = vsel %vm68, %v77, 0.0
    %80 = vadd.xlane.f32.xlu0 %v79
    %v81 = vpop.xlane.xlu0 %80
    %vm82 = vcmp.eq.s32.totalorder %v67, 1
    %v83 = vsel %vm82, %v81, 0.0
    %v84 = vadd.f32 %v74, %v83
    %85 = vrot.lane.b32.xlu0 %v65, 64
    %v86 = vpop.permute.xlu0 %85
    %v88 = vsel %vm68, %v86, 0.0
    %89 = vadd.xlane.f32.xlu0 %v88
    %v90 = vpop.xlane.xlu0 %89
    %vm91 = vcmp.eq.s32.totalorder %v67, 2
    %v92 = vsel %vm91, %v90, 0.0
    %v93 = vadd.f32 %v84, %v92
    %94 = vrot.lane.b32.xlu0 %v65, 32
    %v95 = vpop.permute.xlu0 %94
    %v97 = vsel %vm68, %v95, 0.0
    %98 = vadd.xlane.f32.xlu0 %v97
    %v99 = vpop.xlane.xlu0 %98
    %vm100 = vcmp.eq.s32.totalorder %v67, 3
    %v101 = vsel %vm100, %v99, 0.0
    %v102 = vadd.f32 %v93, %v101
    %v103 = vld [vmem:[#allocation2] sm:$0x3]
    %v104 = vadd.f32 %v103, %v102
    %vm105 = vcmask 25600
    %106 = vst.msk [vmem:[#allocation2] sm:$0x3] %vm105, %v104
    // Predicated region
    $region30: #{tpu_custom_call.1} parent=1 // pred_check
      %p107 = pneg %p56
    $region31: #{tpu_custom_call.1} parent=1 // pred_check_branch
      %109 = sbr.rel (%p107) target = $region33
    $region32: #{tpu_custom_call.1} parent=1 // pred_region
      %v110 = vld [vmem:[#allocation2] sm:$0x3]
      %v111 = vld [vmem:[#allocation8] sm:$0x3]
      %v112 = vadd.f32 %v110, 1e-09
      %v113 = vrsqrt.pop %v112
      %v114 = vmul.f32 %v113, %v112
      %v115 = vmul.f32 %v114, %v113
      %v116 = vmul.f32 0.5, %v115
      %v117 = vsub.f32 1.5, %v116
      %v118 = vmul.f32 %v113, %v117
      %v119 = vmul.f32 %v112, %v118
      %vm120 = vcmp.eq.f32.partialorder %v112, inf
      %v121 = vsel %vm120, %v112, %v119
      %vm122 = vcmp.eq.f32.partialorder %v112, 0.0
      %v123 = vand.u32 %v112, 2147483648
      %v124 = vsel %vm122, %v123, %v121
      %v125 = vsub.f32 1.0, %v124
      %v126 = vmax.f32 %v125, 0.0
      %v127 = vmul.f32 %v111, %v110
      %v128 = vsub.f32 1.0, %v111
      %v129 = vmul.f32 %v128, %v126
      %v130 = vmul.f32 %v129, %v126
      %v131 = vadd.f32 %v127, %v130
      %v132 = vmul.f32 %v131, 0.5
      %v133 = vlaneseq
      %v134 = vshrl.u32 %v133, 7
      %s135 = smul.u32 0, 2
      %v136 = vstv %s135
      %v137 = vadd.s32 %v134, %v136
      %vm138 = vcmp.lt.s32.totalorder %v137, 2
      %v139 = vsel %vm138, %v132, 0.0
      %v140 = vsel %vm105, %v139, 0.0
      %141 = vadd.xlane.f32.xlu0 %v140
      %v142 = vpop.xlane.xlu0 %141
      %v143 = vrot.slane %v142, 4
      %v144 = vadd.f32 %v142, %v143
      %v145 = vrot.slane %v144, 2
      %v146 = vadd.f32 %v144, %v145
      %v147 = vrot.slane %v146, 1
      %v148 = vadd.f32 %v146, %v147
      %s149 = vtos %v148
      %v150 = vstv %s149
      %151 = vst [vmem:[#allocation9] sm:$0x1] %v150
    $region33: #{tpu_custom_call.1} parent=1 // pred_fallthru
      _
    // Predicated region
    $region34: #{tpu_custom_call.1} parent=1 // pred_check
      _
    $region35: #{tpu_custom_call.1} parent=1 // pred_check_branch
      %153 = sbr.rel (0) target = $region37
    $region36: #{tpu_custom_call.1} parent=1 // pred_region
      %155 = vsyncadd [#allocation5], 0
      %s157 = sshll.u32 [#allocation9], 4
      %s158 = int_to_ptr.vmem [resolvable:$true] %s157
      %s159 = sshll.u32 %s3, 4
      %s160 = int_to_ptr.hbm [resolvable:$true] %s159
      %162 = dma.vmem_to_hbm [thread:$0]  %s158, 16, %s160, [#allocation5]
    $region37: #{tpu_custom_call.1} parent=1 // pred_fallthru
      _
    // Predicated region
    $region38: #{tpu_custom_call.1} parent=1 // pred_check
      _
    $region39: #{tpu_custom_call.1} parent=1 // pred_check_branch
      %164 = sbr.rel (0) target = $region41
    $region40: #{tpu_custom_call.1} parent=1 // pred_region
      %166 = dma.done [#allocation5], 16
    $region41: #{tpu_custom_call.1} parent=1 // pred_fallthru
      _
    %167 = vsyncpa [#allocation4], 1
    %168 = vsyncpa [#allocation7], 1
    %169 = vsyncpa [#allocation5], 1

</llo_original>
